<compile_context>
chip_gen: v6e
topology: v6e:2x2x1
jax: 0.10.0
libtpu: 0.0.40
codegen_flags: <defaults>
</compile_context>

<pallas_src>
import jax
import jax.numpy as jnp
from jax.experimental import pallas as pl
from jax.experimental.pallas import tpu as pltpu

_LANES = 128                   # vreg lane width: keep the last dim lane-dense
_TILE_ROWS = 2048              # (2048,128) f32 block = 1 MiB/array/step
_SINGLE_BLOCK_MAX_ROWS = 512   # <= this: single grid=() block (tiny inputs)


def _sum4_kernel(a_ref, b_ref, c_ref, d_ref, o_ref):
    # Balanced add tree: two independent adds co-issue on the 4-wide VALU
    # (compute is fully hidden under the HBM roofline anyway).
    o_ref[...] = (a_ref[...] + b_ref[...]) + (c_ref[...] + d_ref[...])


def sum_net(a, b, c, d):
    assert a.shape == b.shape == c.shape == d.shape
    assert a.dtype == b.dtype == c.dtype == d.dtype
    orig_shape = a.shape
    dtype = a.dtype
    n = a.size
    itemsize = jnp.dtype(dtype).itemsize

    rows = pl.cdiv(n, _LANES)
    pad = rows * _LANES - n          # only the <128-element flat tail, if any

    def to_lane_dense(x):
        flat = x.reshape(-1)
        if pad:
            # Rare path (n not a multiple of 128); zero for the shapes here.
            flat = jnp.pad(flat, (0, pad))
        return flat.reshape(rows, _LANES)

    args = [to_lane_dense(x) for x in (a, b, c, d)]

    cost = pl.CostEstimate(
        flops=3 * n, bytes_accessed=5 * n * itemsize, transcendentals=0)

    if rows <= _SINGLE_BLOCK_MAX_ROWS:
        # Tiny problem: one block equal to the full array (exempt from the
        # (8,128) tile rule); per-step grid overhead would dominate here.
        spec = pl.BlockSpec((rows, _LANES), lambda: (0, 0))
        grid = ()
        compiler_params = pltpu.CompilerParams(
            allow_input_fusion=[True, True, True, True])
    else:
        # Streaming path: 1-D grid of (2048,128) lane-dense blocks, default
        # double-buffered pipeline; ragged last block is masked by Pallas.
        spec = pl.BlockSpec((_TILE_ROWS, _LANES), lambda i: (i, 0))
        grid = (pl.cdiv(rows, _TILE_ROWS),)
        compiler_params = pltpu.CompilerParams(
            dimension_semantics=("parallel",),
            allow_input_fusion=[True, True, True, True])

    out2d = pl.pallas_call(
        _sum4_kernel,
        out_shape=jax.ShapeDtypeStruct((rows, _LANES), dtype),
        grid=grid,
        in_specs=[spec, spec, spec, spec],
        out_specs=spec,
        compiler_params=compiler_params,
        cost_estimate=cost,
    )(*args)

    flat = out2d.reshape(-1)
    if pad:
        flat = flat[:n]              # only when a tail pad was applied
    return flat.reshape(orig_shape)


if __name__ == "__main__":
    key = jax.random.PRNGKey(0)
    ka, kb, kc, kd = jax.random.split(key, 4)
    shape = (2, 4, 16, 16)  # batch=2, channels=4, spatial=16 (as in the module)
    a = jax.random.normal(ka, shape, dtype=jnp.float32)
    b = jax.random.normal(kb, shape, dtype=jnp.float32)
    c = jax.random.normal(kc, shape, dtype=jnp.float32)
    d = jax.random.normal(kd, shape, dtype=jnp.float32)

    out = sum_net(a, b, c, d)
    jax.block_until_ready(out)

    ref = a + b + c + d
    assert out.shape == ref.shape
    assert jnp.allclose(out, ref, atol=1e-6), "mismatch vs reference sum"

    print("KERNEL_OK")
</pallas_src>

<mosaic_0001>
module attributes {stable_mosaic.version = 11 : i64} {
  func.func @_sum4_kernel(%arg0: memref<16x128xf32, #tpu.memory_space<vmem>>, %arg1: memref<16x128xf32, #tpu.memory_space<vmem>>, %arg2: memref<16x128xf32, #tpu.memory_space<vmem>>, %arg3: memref<16x128xf32, #tpu.memory_space<vmem>>, %arg4: memref<16x128xf32, #tpu.memory_space<vmem>>) attributes {dimension_semantics = [], scalar_prefetch = 0 : i64, scratch_operands = 0 : i64, tpu.core_type = #tpu.core_type<tc>} {
    %c0 = arith.constant 0 : index
    %c0_0 = arith.constant 0 : index
    %0 = vector.load %arg0[%c0, %c0_0] : memref<16x128xf32, #tpu.memory_space<vmem>>, vector<16x128xf32>
    %c0_1 = arith.constant 0 : index
    %c0_2 = arith.constant 0 : index
    %1 = vector.load %arg1[%c0_1, %c0_2] : memref<16x128xf32, #tpu.memory_space<vmem>>, vector<16x128xf32>
    %2 = arith.addf %0, %1 : vector<16x128xf32>
    %c0_3 = arith.constant 0 : index
    %c0_4 = arith.constant 0 : index
    %3 = vector.load %arg2[%c0_3, %c0_4] : memref<16x128xf32, #tpu.memory_space<vmem>>, vector<16x128xf32>
    %c0_5 = arith.constant 0 : index
    %c0_6 = arith.constant 0 : index
    %4 = vector.load %arg3[%c0_5, %c0_6] : memref<16x128xf32, #tpu.memory_space<vmem>>, vector<16x128xf32>
    %5 = arith.addf %3, %4 : vector<16x128xf32>
    %6 = arith.addf %2, %5 : vector<16x128xf32>
    %c0_7 = arith.constant 0 : index
    %c0_8 = arith.constant 0 : index
    %7 = vector.load %arg4[%c0_7, %c0_8] : memref<16x128xf32, #tpu.memory_space<vmem>>, vector<16x128xf32>
    tpu.vector_store %arg4[%c0_7, %c0_8], %6 {strides = array<i32>} : memref<16x128xf32, #tpu.memory_space<vmem>>, vector<16x128xf32>,
    return
  }
}

</mosaic_0001>

<llo_original>
// kernel: tpu_custom_call.1
$region0: #{tpu_custom_call.1}
  #allocation0 [shape = 'u32[]', space=smem, size = 0x4, offset = 0x4, fixed_abs, tag = 'smem constant byte address 0x4 - core index']
  #allocation1 [shape = 'u32[144,128]{1,0:T(1,128)}', space=vmem, size = 0x12000, scoped, tag = 'internal scratch']
  %s0 = inlined_call_operand.hbm [shape: f32[16,128], index: 0, kind: input, shape index: {}]
  %s1 = inlined_call_operand.hbm [shape: f32[16,128], index: 1, kind: input, shape index: {}]
  %s2 = inlined_call_operand.hbm [shape: f32[16,128], index: 2, kind: input, shape index: {}]
  %s3 = inlined_call_operand.hbm [shape: f32[16,128], index: 3, kind: input, shape index: {}]
  %s4 = inlined_call_operand.hbm [shape: f32[16,128], index: 4, kind: output, shape index: {}]
  %s5 = sld [smem:[#allocation0]]
  $region42: #{tpu_custom_call.1} parent=0
    _
  %s7 = ssub.s32 1, %s5
  %s8 = scalar_select 0, %s7, %s5
  $region1: #{tpu_custom_call.1} parent=0
    #allocation2 [shape = 'u8[8192]{0}', space=vmem, size = 0x2000, scoped, tag = 'input window, operand 0, single buffered']
    #allocation3 [shape = 's32[1]{0}', space=sflag, size = 0x4, scoped, tag = 'scoped memory for tpu_custom_call.1']
    #allocation4 [shape = 's32[1]{0}', space=sflag, size = 0x4, scoped, tag = 'scoped memory for tpu_custom_call.1']
    #allocation5 [shape = 'u8[8192]{0}', space=vmem, size = 0x2000, scoped, tag = 'input window, operand 1, single buffered']
    #allocation6 [shape = 's32[1]{0}', space=sflag, size = 0x4, scoped, tag = 'scoped memory for tpu_custom_call.1']
    #allocation7 [shape = 'u8[8192]{0}', space=vmem, size = 0x2000, scoped, tag = 'input window, operand 2, single buffered']
    #allocation8 [shape = 'u8[8192]{0}', space=vmem, size = 0x2000, scoped, tag = 'input window, operand 3, single buffered']
    #allocation9 [shape = 's32[1]{0}', space=sflag, size = 0x4, scoped, tag = 'scoped memory for tpu_custom_call.1']
    #allocation10 [shape = 'u8[8192]{0}', space=vmem, size = 0x2000, scoped, tag = 'output window, operand 0, single buffered']
    %9 = vsyncpa [#allocation3], 0
    %10 = vsyncpa [#allocation6], 0
    %11 = vsyncpa [#allocation9], 0
    %12 = vsyncpa [#allocation4], 0
    // Predicated region
    $region2: #{tpu_custom_call.1} parent=1 // pred_check
      _
    $region3: #{tpu_custom_call.1} parent=1 // pred_check_branch
      %14 = sbr.rel (0) target = $region5
    $region4: #{tpu_custom_call.1} parent=1 // pred_region
      %s16 = ssub.s32 256, 256
      %17 = vsyncadd [#allocation3], %s16
      %s18 = sshll.u32 [#allocation2], 4
      %s19 = int_to_ptr.vmem [resolvable:$true] %s18
      %24 = dma.hbm_to_vmem [thread:$0]  %s0, 256, %s19, [#allocation3], 128, 128, 8
    $region5: #{tpu_custom_call.1} parent=1 // pred_fallthru
      _
    // Predicated region
    $region6: #{tpu_custom_call.1} parent=1 // pred_check
      _
    $region7: #{tpu_custom_call.1} parent=1 // pred_check_branch
      %26 = sbr.rel (0) target = $region9
    $region8: #{tpu_custom_call.1} parent=1 // pred_region
      %s28 = ssub.s32 256, 256
      %29 = vsyncadd [#allocation6], %s28
      %s30 = sshll.u32 [#allocation5], 4
      %s31 = int_to_ptr.vmem [resolvable:$true] %s30
      %36 = dma.hbm_to_vmem [thread:$0]  %s1, 256, %s31, [#allocation6], 128, 128, 8
    $region9: #{tpu_custom_call.1} parent=1 // pred_fallthru
      _
    // Predicated region
    $region10: #{tpu_custom_call.1} parent=1 // pred_check
      _
    $region11: #{tpu_custom_call.1} parent=1 // pred_check_branch
      %38 = sbr.rel (0) target = $region13
    $region12: #{tpu_custom_call.1} parent=1 // pred_region
      %s40 = ssub.s32 256, 256
      %41 = vsyncadd [#allocation6], %s40
      %s42 = sshll.u32 [#allocation7], 4
      %s43 = int_to_ptr.vmem [resolvable:$true] %s42
      %48 = dma.hbm_to_vmem [thread:$0]  %s2, 256, %s43, [#allocation6], 128, 128, 8
    $region13: #{tpu_custom_call.1} parent=1 // pred_fallthru
      _
    // Predicated region
    $region14: #{tpu_custom_call.1} parent=1 // pred_check
      _
    $region15: #{tpu_custom_call.1} parent=1 // pred_check_branch
      %50 = sbr.rel (0) target = $region17
    $region16: #{tpu_custom_call.1} parent=1 // pred_region
      %s52 = ssub.s32 256, 256
      %53 = vsyncadd [#allocation9], %s52
      %s54 = sshll.u32 [#allocation8], 4
      %s55 = int_to_ptr.vmem [resolvable:$true] %s54
      %60 = dma.hbm_to_vmem [thread:$0]  %s3, 256, %s55, [#allocation9], 128, 128, 8
    $region17: #{tpu_custom_call.1} parent=1 // pred_fallthru
      _
    // Predicated region
    $region18: #{tpu_custom_call.1} parent=1 // pred_check
      _
    $region19: #{tpu_custom_call.1} parent=1 // pred_check_branch
      %62 = sbr.rel (0) target = $region21
    $region20: #{tpu_custom_call.1} parent=1 // pred_region
      %63 = dma.done [#allocation3], 256
    $region21: #{tpu_custom_call.1} parent=1 // pred_fallthru
      _
    // Predicated region
    $region22: #{tpu_custom_call.1} parent=1 // pred_check
      _
    $region23: #{tpu_custom_call.1} parent=1 // pred_check_branch
      %65 = sbr.rel (0) target = $region25
    $region24: #{tpu_custom_call.1} parent=1 // pred_region
      %66 = dma.done [#allocation6], 256
    $region25: #{tpu_custom_call.1} parent=1 // pred_fallthru
      _
    // Predicated region
    $region26: #{tpu_custom_call.1} parent=1 // pred_check
      _
    $region27: #{tpu_custom_call.1} parent=1 // pred_check_branch
      %68 = sbr.rel (0) target = $region29
    $region28: #{tpu_custom_call.1} parent=1 // pred_region
      %69 = dma.done [#allocation6], 256
    $region29: #{tpu_custom_call.1} parent=1 // pred_fallthru
      _
    // Predicated region
    $region30: #{tpu_custom_call.1} parent=1 // pred_check
      _
    $region31: #{tpu_custom_call.1} parent=1 // pred_check_branch
      %71 = sbr.rel (0) target = $region33
    $region32: #{tpu_custom_call.1} parent=1 // pred_region
      %72 = dma.done [#allocation9], 256
    $region33: #{tpu_custom_call.1} parent=1 // pred_fallthru
      _
    %v73 = vld [vmem:[#allocation2] sm:$0xff]
    %v74 = vld [vmem:[#allocation2 + $0x8] sm:$0xff]
    %v75 = vld [vmem:[#allocation5] sm:$0xff]
    %v76 = vld [vmem:[#allocation5 + $0x8] sm:$0xff]
    %v77 = vadd.f32 %v73, %v75
    %v78 = vadd.f32 %v74, %v76
    %v79 = vld [vmem:[#allocation7] sm:$0xff]
    %v80 = vld [vmem:[#allocation7 + $0x8] sm:$0xff]
    %v81 = vld [vmem:[#allocation8] sm:$0xff]
    %v82 = vld [vmem:[#allocation8 + $0x8] sm:$0xff]
    %v83 = vadd.f32 %v79, %v81
    %v84 = vadd.f32 %v80, %v82
    %v85 = vadd.f32 %v77, %v83
    %v86 = vadd.f32 %v78, %v84
    %87 = vst [vmem:[#allocation10] sm:$0xff] %v85
    %88 = vst [vmem:[#allocation10 + $0x8] sm:$0xff] %v86
    // Predicated region
    $region34: #{tpu_custom_call.1} parent=1 // pred_check
      _
    $region35: #{tpu_custom_call.1} parent=1 // pred_check_branch
      %90 = sbr.rel (0) target = $region37
    $region36: #{tpu_custom_call.1} parent=1 // pred_region
      %s92 = ssub.s32 256, 256
      %93 = vsyncadd [#allocation4], %s92
      %s94 = sshll.u32 [#allocation10], 4
      %s95 = int_to_ptr.vmem [resolvable:$true] %s94
      %100 = dma.vmem_to_hbm [thread:$0]  %s95, 256, %s4, [#allocation4], 128, 128, 8
    $region37: #{tpu_custom_call.1} parent=1 // pred_fallthru
      _
    // Predicated region
    $region38: #{tpu_custom_call.1} parent=1 // pred_check
      _
    $region39: #{tpu_custom_call.1} parent=1 // pred_check_branch
      %102 = sbr.rel (0) target = $region41
    $region40: #{tpu_custom_call.1} parent=1 // pred_region
      %103 = dma.done [#allocation4], 256
    $region41: #{tpu_custom_call.1} parent=1 // pred_fallthru
      _
    %104 = vsyncpa [#allocation3], 1
    %105 = vsyncpa [#allocation6], 1
    %106 = vsyncpa [#allocation9], 1
    %107 = vsyncpa [#allocation4], 1

</llo_original>
